<compile_context>
chip_gen: v5e
topology: v5e:2x2
jax: 0.10.0
libtpu: 0.0.40
codegen_flags: <defaults>
</compile_context>

<pallas_src>
import jax
import jax.numpy as jnp
from jax.experimental import pallas as pl
from jax.experimental.pallas import tpu as pltpu


def _round_up(n: int, m: int) -> int:
    return ((n + m - 1) // m) * m


def snake_brain_kernel(x_ref,
                       w1_ref, b1_ref,
                       w2_ref, b2_ref,
                       w3_ref, b3_ref,
                       w4_ref, b4_ref,
                       o_ref):
    # Fully fused MLP on one batch tile.
    #  - Every matmul accumulates in f32 on the MXU (preferred_element_type).
    #  - Hidden-layer epilogue (bias + ReLU) runs in the bias dtype: bf16 on
    #    the default path (native VPU bf16 on v6e/v7x), f32 on the f32 path.
    #  - Intermediates fed back into the next dot are stored in the compute
    #    dtype (bf16 by default) -> halved VMEM round-trip / MXU LHS pushes.
    #  - Final layer: f32 bias add, f32 output (no ReLU).
    cd = w1_ref.dtype  # compute dtype (bf16 default, f32 optional)

    h = jnp.dot(x_ref[...], w1_ref[...], preferred_element_type=jnp.float32)
    h = jnp.maximum(h.astype(b1_ref.dtype) + b1_ref[...], 0.0).astype(cd)

    h = jnp.dot(h, w2_ref[...], preferred_element_type=jnp.float32)
    h = jnp.maximum(h.astype(b2_ref.dtype) + b2_ref[...], 0.0).astype(cd)

    h = jnp.dot(h, w3_ref[...], preferred_element_type=jnp.float32)
    h = jnp.maximum(h.astype(b3_ref.dtype) + b3_ref[...], 0.0).astype(cd)

    out = jnp.dot(h, w4_ref[...], preferred_element_type=jnp.float32) + b4_ref[...]
    o_ref[...] = out.astype(o_ref.dtype)


def snake_brain_forward(x, params, *, block_rows=8192,
                        compute_dtype=jnp.bfloat16, vmem_limit_bytes=None):
    """Run the fused SnakeBrain MLP.

    x: (B, 16). params: dict of (in,out) weights and (1,out) f32 biases.
    block_rows: max batch-tile size (sweep 8-16K on v5e/v6e; <=8K on v7x
                unless vmem_limit_bytes is raised).
    compute_dtype: bf16 (default) halves HBM reads, MXU pushes and VMEM
                   intermediate traffic; pass None for a pure-f32 path.
                   Accumulation is always f32; final-layer bias/output f32.
    """
    B = x.shape[0]
    if compute_dtype is None:
        compute_dtype = x.dtype

    w1, b1 = params["w1"], params["b1"]
    w2, b2 = params["w2"], params["b2"]
    w3, b3 = params["w3"], params["b3"]
    w4, b4 = params["w4"], params["b4"]

    x = x.astype(compute_dtype)
    w1, w2, w3, w4 = (w.astype(compute_dtype) for w in (w1, w2, w3, w4))
    # Hidden-layer biases follow the compute dtype (bf16 epilogue on v6e/v7x);
    # the final-layer bias stays f32 (added to the f32 accumulator).
    b1, b2, b3 = (b.astype(compute_dtype) for b in (b1, b2, b3))
    b4 = b4.astype(jnp.float32)

    # Tile selection:
    #  * multiple of 16 (covers f32 and bf16 sublane packing),
    #  * aim for >= 2 grid steps so both v7x TensorCores get work,
    #  * NO host-side padding of x: Pallas handles the ragged final block
    #    (rows are independent, OOB output rows are discarded on write-back).
    T = max(16, min(block_rows, _round_up(max(B // 2, 1), 16)))
    grid = (pl.cdiv(B, T),)

    # x / out march along the batch grid; params use a constant block index so
    # they are fetched once and stay resident in VMEM (~8 KB total in bf16).
    batch_spec = lambda n: pl.BlockSpec((T, n), lambda i: (i, 0))
    const_spec = lambda a: pl.BlockSpec(a.shape, lambda i: (0, 0))

    nbytes = lambda a: a.size * a.dtype.itemsize
    params_bytes = sum(nbytes(a) for a in (w1, b1, w2, b2, w3, b3, w4, b4))
    cost = pl.CostEstimate(
        flops=2 * (16 * 64 + 64 * 32 + 32 * 16 + 16 * 4) * B,   # 7296 * B
        transcendentals=0,
        bytes_accessed=nbytes(x) + B * 4 * 4 + params_bytes)

    cp_kwargs = dict(dimension_semantics=("parallel",))
    if vmem_limit_bytes is not None:
        cp_kwargs["vmem_limit_bytes"] = vmem_limit_bytes

    out = pl.pallas_call(
        snake_brain_kernel,
        out_shape=jax.ShapeDtypeStruct((B, 4), jnp.float32),
        grid=grid,
        in_specs=[
            batch_spec(16),
            const_spec(w1), const_spec(b1),
            const_spec(w2), const_spec(b2),
            const_spec(w3), const_spec(b3),
            const_spec(w4), const_spec(b4),
        ],
        out_specs=batch_spec(4),
        compiler_params=pltpu.CompilerParams(**cp_kwargs),
        cost_estimate=cost,
    )(x, w1, b1, w2, b2, w3, b3, w4, b4)
    return out


def init_params(key):
    """Deterministic init mimicking nn.Linear default (uniform +/- 1/sqrt(fan_in))."""
    dims = [(16, 64), (64, 32), (32, 16), (16, 4)]
    params = {}
    keys = jax.random.split(key, 2 * len(dims))
    for i, (fan_in, fan_out) in enumerate(dims):
        bound = 1.0 / jnp.sqrt(jnp.float32(fan_in))
        w = jax.random.uniform(keys[2 * i], (fan_in, fan_out),
                               minval=-bound, maxval=bound, dtype=jnp.float32)
        b = jax.random.uniform(keys[2 * i + 1], (1, fan_out),
                               minval=-bound, maxval=bound, dtype=jnp.float32)
        params[f"w{i + 1}"] = w
        params[f"b{i + 1}"] = b
    return params


def reference_forward(x, params, compute_dtype=jnp.bfloat16):
    """Pure-JAX reference mirroring the kernel's numerics exactly:
    compute-dtype activations/weights/hidden-biases, f32 MXU accumulation,
    compute-dtype hidden epilogue, f32 final bias/output."""
    if compute_dtype is None:
        compute_dtype = x.dtype
    cd = compute_dtype
    h = x.astype(cd)
    for i in (1, 2, 3):
        w = params[f"w{i}"].astype(cd)
        b = params[f"b{i}"].astype(cd)
        h = jnp.dot(h, w, preferred_element_type=jnp.float32)
        h = jnp.maximum(h.astype(cd) + b, 0.0).astype(cd)
    out = jnp.dot(h, params["w4"].astype(cd),
                  preferred_element_type=jnp.float32) + params["b4"]
    return out


if __name__ == "__main__":
    key = jax.random.PRNGKey(0)
    pkey, xkey1, xkey2 = jax.random.split(key, 3)
    params = init_params(pkey)

    # 1) Small batch, default bf16 path. T=32 -> grid=(2,), exact tiling.
    x_small = jax.random.normal(xkey1, (64, 16), dtype=jnp.float32)
    out_small = jax.block_until_ready(snake_brain_forward(x_small, params))
    ref_small = reference_forward(x_small, params, compute_dtype=jnp.bfloat16)
    assert out_small.shape == (64, 4)
    assert jnp.allclose(out_small, ref_small, atol=2e-2, rtol=2e-2), \
        "bf16 small-batch mismatch vs. bf16-quantized JAX reference"

    # 2) Ragged batch (1000 rows): T=512 -> grid=(2,), final block is partial.
    #    Exercises the no-pad / masked-writeback path.
    x_big = jax.random.normal(xkey2, (1000, 16), dtype=jnp.float32)
    out_big = jax.block_until_ready(snake_brain_forward(x_big, params))
    ref_big = reference_forward(x_big, params, compute_dtype=jnp.bfloat16)
    assert out_big.shape == (1000, 4)
    assert jnp.allclose(out_big, ref_big, atol=2e-2, rtol=2e-2), \
        "bf16 ragged-batch mismatch vs. bf16-quantized JAX reference"

    # 3) Pure-f32 path vs. f32 reference (tight tolerance).
    out_f32 = jax.block_until_ready(
        snake_brain_forward(x_big, params, compute_dtype=None))
    ref_f32 = reference_forward(x_big, params, compute_dtype=None)
    assert jnp.allclose(out_f32, ref_f32, atol=1e-5, rtol=1e-5), \
        "f32 path mismatch vs. f32 JAX reference"

    print("KERNEL_OK")
</pallas_src>

<mosaic_0001>
module attributes {stable_mosaic.version = 11 : i64} {
  func.func @snake_brain_kernel(%arg0: i32, %arg1: memref<32x16xbf16, #tpu.memory_space<vmem>>, %arg2: memref<16x64xbf16, #tpu.memory_space<vmem>>, %arg3: memref<1x64xbf16, #tpu.memory_space<vmem>>, %arg4: memref<64x32xbf16, #tpu.memory_space<vmem>>, %arg5: memref<1x32xbf16, #tpu.memory_space<vmem>>, %arg6: memref<32x16xbf16, #tpu.memory_space<vmem>>, %arg7: memref<1x16xbf16, #tpu.memory_space<vmem>>, %arg8: memref<16x4xbf16, #tpu.memory_space<vmem>>, %arg9: memref<1x4xf32, #tpu.memory_space<vmem>>, %arg10: memref<32x4xf32, #tpu.memory_space<vmem>>) attributes {dimension_semantics = [#tpu.dimension_semantics<parallel>], iteration_bounds = array<i64: 2>, scalar_prefetch = 0 : i64, scratch_operands = 0 : i64, tpu.core_type = #tpu.core_type<tc>, window_params = [{transform_indices = @transform_0, window_bounds = array<i64: 32, 16>}, {pipeline_mode = #tpu.pipeline_mode<synchronous>, transform_indices = @transform_1, window_bounds = array<i64: 16, 64>}, {pipeline_mode = #tpu.pipeline_mode<synchronous>, transform_indices = @transform_2, window_bounds = array<i64: 1, 64>}, {pipeline_mode = #tpu.pipeline_mode<synchronous>, transform_indices = @transform_3, window_bounds = array<i64: 64, 32>}, {pipeline_mode = #tpu.pipeline_mode<synchronous>, transform_indices = @transform_4, window_bounds = array<i64: 1, 32>}, {pipeline_mode = #tpu.pipeline_mode<synchronous>, transform_indices = @transform_5, window_bounds = array<i64: 32, 16>}, {pipeline_mode = #tpu.pipeline_mode<synchronous>, transform_indices = @transform_6, window_bounds = array<i64: 1, 16>}, {pipeline_mode = #tpu.pipeline_mode<synchronous>, transform_indices = @transform_7, window_bounds = array<i64: 16, 4>}, {pipeline_mode = #tpu.pipeline_mode<synchronous>, transform_indices = @transform_8, window_bounds = array<i64: 1, 4>}, {transform_indices = @transform_9, window_bounds = array<i64: 32, 4>}]} {
    %c0 = arith.constant 0 : index
    %c0_0 = arith.constant 0 : index
    %0 = vector.load %arg1[%c0, %c0_0] : memref<32x16xbf16, #tpu.memory_space<vmem>>, vector<32x16xbf16>
    %c0_1 = arith.constant 0 : index
    %c0_2 = arith.constant 0 : index
    %1 = vector.load %arg2[%c0_1, %c0_2] : memref<16x64xbf16, #tpu.memory_space<vmem>>, vector<16x64xbf16>
    %cst = arith.constant dense<0.000000e+00> : vector<32x64xf32>
    %2 = tpu.matmul %0, %1, %cst {dimension_numbers = #tpu.dot_dimension_numbers<[1], [0], [0], [1], [0, 0, 1, 1], [], []>} : vector<32x16xbf16>, vector<16x64xbf16>, vector<32x64xf32> -> vector<32x64xf32>
    %3 = arith.truncf %2 : vector<32x64xf32> to vector<32x64xbf16>
    %c0_3 = arith.constant 0 : index
    %c0_4 = arith.constant 0 : index
    %4 = vector.load %arg3[%c0_3, %c0_4] : memref<1x64xbf16, #tpu.memory_space<vmem>>, vector<1x64xbf16>
    %5 = vector.broadcast %4 : vector<1x64xbf16> to vector<32x64xbf16>
    %6 = arith.addf %3, %5 : vector<32x64xbf16>
    %cst_5 = arith.constant 0.000000e+00 : bf16
    %7 = vector.broadcast %cst_5 : bf16 to vector<32x64xbf16>
    %8 = arith.maximumf %6, %7 : vector<32x64xbf16>
    %c0_6 = arith.constant 0 : index
    %c0_7 = arith.constant 0 : index
    %9 = vector.load %arg4[%c0_6, %c0_7] : memref<64x32xbf16, #tpu.memory_space<vmem>>, vector<64x32xbf16>
    %cst_8 = arith.constant dense<0.000000e+00> : vector<32x32xf32>
    %10 = tpu.matmul %8, %9, %cst_8 {dimension_numbers = #tpu.dot_dimension_numbers<[1], [0], [0], [1], [0, 0, 1, 1], [], []>} : vector<32x64xbf16>, vector<64x32xbf16>, vector<32x32xf32> -> vector<32x32xf32>
    %11 = arith.truncf %10 : vector<32x32xf32> to vector<32x32xbf16>
    %c0_9 = arith.constant 0 : index
    %c0_10 = arith.constant 0 : index
    %12 = vector.load %arg5[%c0_9, %c0_10] : memref<1x32xbf16, #tpu.memory_space<vmem>>, vector<1x32xbf16>
    %13 = vector.broadcast %12 : vector<1x32xbf16> to vector<32x32xbf16>
    %14 = arith.addf %11, %13 : vector<32x32xbf16>
    %cst_11 = arith.constant 0.000000e+00 : bf16
    %15 = vector.broadcast %cst_11 : bf16 to vector<32x32xbf16>
    %16 = arith.maximumf %14, %15 : vector<32x32xbf16>
    %c0_12 = arith.constant 0 : index
    %c0_13 = arith.constant 0 : index
    %17 = vector.load %arg6[%c0_12, %c0_13] : memref<32x16xbf16, #tpu.memory_space<vmem>>, vector<32x16xbf16>
    %cst_14 = arith.constant dense<0.000000e+00> : vector<32x16xf32>
    %18 = tpu.matmul %16, %17, %cst_14 {dimension_numbers = #tpu.dot_dimension_numbers<[1], [0], [0], [1], [0, 0, 1, 1], [], []>} : vector<32x32xbf16>, vector<32x16xbf16>, vector<32x16xf32> -> vector<32x16xf32>
    %19 = arith.truncf %18 : vector<32x16xf32> to vector<32x16xbf16>
    %c0_15 = arith.constant 0 : index
    %c0_16 = arith.constant 0 : index
    %20 = vector.load %arg7[%c0_15, %c0_16] : memref<1x16xbf16, #tpu.memory_space<vmem>>, vector<1x16xbf16>
    %21 = vector.broadcast %20 : vector<1x16xbf16> to vector<32x16xbf16>
    %22 = arith.addf %19, %21 : vector<32x16xbf16>
    %cst_17 = arith.constant 0.000000e+00 : bf16
    %23 = vector.broadcast %cst_17 : bf16 to vector<32x16xbf16>
    %24 = arith.maximumf %22, %23 : vector<32x16xbf16>
    %c0_18 = arith.constant 0 : index
    %c0_19 = arith.constant 0 : index
    %25 = vector.load %arg8[%c0_18, %c0_19] : memref<16x4xbf16, #tpu.memory_space<vmem>>, vector<16x4xbf16>
    %cst_20 = arith.constant dense<0.000000e+00> : vector<32x4xf32>
    %26 = tpu.matmul %24, %25, %cst_20 {dimension_numbers = #tpu.dot_dimension_numbers<[1], [0], [0], [1], [0, 0, 1, 1], [], []>} : vector<32x16xbf16>, vector<16x4xbf16>, vector<32x4xf32> -> vector<32x4xf32>
    %c0_21 = arith.constant 0 : index
    %c0_22 = arith.constant 0 : index
    %27 = vector.load %arg9[%c0_21, %c0_22] : memref<1x4xf32, #tpu.memory_space<vmem>>, vector<1x4xf32>
    %28 = vector.broadcast %27 : vector<1x4xf32> to vector<32x4xf32>
    %29 = arith.addf %26, %28 : vector<32x4xf32>
    %c0_23 = arith.constant 0 : index
    %c0_24 = arith.constant 0 : index
    %30 = vector.load %arg10[%c0_23, %c0_24] : memref<32x4xf32, #tpu.memory_space<vmem>>, vector<32x4xf32>
    tpu.vector_store %arg10[%c0_23, %c0_24], %29 {strides = array<i32>} : memref<32x4xf32, #tpu.memory_space<vmem>>, vector<32x4xf32>,
    return
  }
  func.func @transform_0(%arg0: i32) -> (i32, i32) {
    %c0_i32 = arith.constant 0 : i32
    %c0_i32_0 = arith.constant 0 : i32
    return %arg0, %c0_i32 : i32, i32
  }
  func.func @transform_1(%arg0: i32) -> (i32, i32) {
    %c0_i32 = arith.constant 0 : i32
    %c0_i32_0 = arith.constant 0 : i32
    %c0_i32_1 = arith.constant 0 : i32
    return %c0_i32, %c0_i32_0 : i32, i32
  }
  func.func @transform_2(%arg0: i32) -> (i32, i32) {
    %c0_i32 = arith.constant 0 : i32
    %c0_i32_0 = arith.constant 0 : i32
    %c0_i32_1 = arith.constant 0 : i32
    return %c0_i32, %c0_i32_0 : i32, i32
  }
  func.func @transform_3(%arg0: i32) -> (i32, i32) {
    %c0_i32 = arith.constant 0 : i32
    %c0_i32_0 = arith.constant 0 : i32
    %c0_i32_1 = arith.constant 0 : i32
    return %c0_i32, %c0_i32_0 : i32, i32
  }
  func.func @transform_4(%arg0: i32) -> (i32, i32) {
    %c0_i32 = arith.constant 0 : i32
    %c0_i32_0 = arith.constant 0 : i32
    %c0_i32_1 = arith.constant 0 : i32
    return %c0_i32, %c0_i32_0 : i32, i32
  }
  func.func @transform_5(%arg0: i32) -> (i32, i32) {
    %c0_i32 = arith.constant 0 : i32
    %c0_i32_0 = arith.constant 0 : i32
    %c0_i32_1 = arith.constant 0 : i32
    return %c0_i32, %c0_i32_0 : i32, i32
  }
  func.func @transform_6(%arg0: i32) -> (i32, i32) {
    %c0_i32 = arith.constant 0 : i32
    %c0_i32_0 = arith.constant 0 : i32
    %c0_i32_1 = arith.constant 0 : i32
    return %c0_i32, %c0_i32_0 : i32, i32
  }
  func.func @transform_7(%arg0: i32) -> (i32, i32) {
    %c0_i32 = arith.constant 0 : i32
    %c0_i32_0 = arith.constant 0 : i32
    %c0_i32_1 = arith.constant 0 : i32
    return %c0_i32, %c0_i32_0 : i32, i32
  }
  func.func @transform_8(%arg0: i32) -> (i32, i32) {
    %c0_i32 = arith.constant 0 : i32
    %c0_i32_0 = arith.constant 0 : i32
    %c0_i32_1 = arith.constant 0 : i32
    return %c0_i32, %c0_i32_0 : i32, i32
  }
  func.func @transform_9(%arg0: i32) -> (i32, i32) {
    %c0_i32 = arith.constant 0 : i32
    %c0_i32_0 = arith.constant 0 : i32
    return %arg0, %c0_i32 : i32, i32
  }
}

</mosaic_0001>

<llo_original>
// kernel: tpu_custom_call.1
$region0: #{tpu_custom_call.1}
  #allocation0 [shape = 'u32[]', space=smem, size = 0x4, offset = 0x4, fixed_abs, tag = 'smem constant byte address 0x4 - core index']
  #allocation1 [shape = 'u32[72,128]{1,0:T(1,128)}', space=vmem, size = 0x9000, scoped, tag = 'internal scratch']
  %s0 = inlined_call_operand.vmem [shape: bf16[64,16], index: 0, kind: input, shape index: {}]
  %s1 = inlined_call_operand.vmem [shape: bf16[16,64], index: 1, kind: input, shape index: {}]
  %s2 = inlined_call_operand.vmem [shape: bf16[1,64], index: 2, kind: input, shape index: {}]
  %s3 = inlined_call_operand.vmem [shape: bf16[64,32], index: 3, kind: input, shape index: {}]
  %s4 = inlined_call_operand.vmem [shape: bf16[1,32], index: 4, kind: input, shape index: {}]
  %s5 = inlined_call_operand.vmem [shape: bf16[32,16], index: 5, kind: input, shape index: {}]
  %s6 = inlined_call_operand.vmem [shape: bf16[1,16], index: 6, kind: input, shape index: {}]
  %s7 = inlined_call_operand.vmem [shape: bf16[16,4], index: 7, kind: input, shape index: {}]
  %s8 = inlined_call_operand.vmem [shape: f32[1,4], index: 8, kind: input, shape index: {}]
  %s9 = inlined_call_operand.vmem [shape: f32[64,4], index: 9, kind: output, shape index: {}]
  %s10 = sld [smem:[#allocation0]]
  $region69: #{tpu_custom_call.1} parent=0
    _
  %s12 = ssub.s32 1, %s10
  %s13 = scalar_select 0, %s12, %s10
  loop: start=0, step=1, limit=4
  $region2: #{tpu_custom_call.1} parent=0 // loop_pre_header
    _
  $region3: #{tpu_custom_call.1} parent=0 // loop_header
    %s15 = sphi 0, %s19
    %p16 = scmp.ge.s32.totalorder %s15, 4
    %s25 = sphi 0, %s27
    %s28 = sphi 0, %s25
    %s29 = sphi 0, %s28
    %s45 = sphi 0, %s29
    %s49 = sphi 0, %s49
    %s51 = sphi 0, %s49
    %s52 = sphi 0, %s51
    %s66 = sphi 0, %s52
    %s70 = sphi 0, %s70
    %s72 = sphi 0, %s70
    %s73 = sphi 0, %s72
    %s87 = sphi 0, %s73
    %s91 = sphi 0, %s91
    %s93 = sphi 0, %s91
    %s94 = sphi 0, %s93
    %s108 = sphi 0, %s94
    %s112 = sphi 0, %s112
    %s114 = sphi 0, %s112
    %s115 = sphi 0, %s114
    %s129 = sphi 0, %s115
    %s133 = sphi 0, %s133
    %s135 = sphi 0, %s133
    %s136 = sphi 0, %s135
    %s150 = sphi 0, %s136
    %s154 = sphi 0, %s154
    %s156 = sphi 0, %s154
    %s157 = sphi 0, %s156
    %s171 = sphi 0, %s157
    %s175 = sphi 0, %s175
    %s177 = sphi 0, %s175
    %s178 = sphi 0, %s177
    %s192 = sphi 0, %s178
    %s196 = sphi 0, %s196
    %s198 = sphi 0, %s196
    %s199 = sphi 0, %s198
    %s213 = sphi 0, %s199
    %s219 = sphi 0, %s221
    %s222 = sphi 0, %s219
    %s223 = sphi 0, %s222
    %s239 = sphi 0, %s223
  $region4: #{tpu_custom_call.1} parent=0 // loop_header_branch
    %18 = sbr.rel (%p16) target = $region8
  $region5: #{tpu_custom_call.1} parent=0 // loop_body
    %s20 = ssub.s32 %s15, 1
    %s21 = ssub.s32 %s15, 2
    %s22 = sadd.s32 %s15, 1
    %s23 = ssub.s32 %s15, %s22
    %p24 = scmp.eq.s32.totalorder %s23, 0
    %s26 = sadd.s32 %s25, 1
    %s27 = scalar_select %p24, %s25, %s26
    %p30 = pneg %p24
    %p31 = scmp.eq.s32.totalorder %s15, 1
    %p32 = por %p30, %p31
    %p33 = scmp.ne.s32.totalorder %s25, %s28
    %p34 = scmp.eq.s32.totalorder %s15, 0
    %p35 = por %p33, %p34
    %p36 = scmp.ne.s32.totalorder %s25, %s28
    %p37 = scmp.eq.s32.totalorder %s20, 1
    %p38 = por %p36, %p37
    %p39 = scmp.ne.s32.totalorder %s28, %s29
    %p40 = scmp.eq.s32.totalorder %s20, 0
    %p41 = por %p39, %p40
    %p42 = scmp.ne.s32.totalorder %s28, %s29
    %p43 = scmp.eq.s32.totalorder %s21, 1
    %p44 = por %p42, %p43
    %p46 = scmp.ne.s32.totalorder %s29, %s45
    %p47 = scmp.eq.s32.totalorder %s21, 0
    %p48 = por %p46, %p47
    %s50 = sadd.s32 %s49, 1
    %p53 = scmp.eq.s32.totalorder %s15, 1
    %p54 = scmp.ne.s32.totalorder %s49, %s51
    %p55 = scmp.eq.s32.totalorder %s15, 0
    %p56 = por %p54, %p55
    %p57 = scmp.ne.s32.totalorder %s49, %s51
    %p58 = scmp.eq.s32.totalorder %s20, 1
    %p59 = por %p57, %p58
    %p60 = scmp.ne.s32.totalorder %s51, %s52
    %p61 = scmp.eq.s32.totalorder %s20, 0
    %p62 = por %p60, %p61
    %p63 = scmp.ne.s32.totalorder %s51, %s52
    %p64 = scmp.eq.s32.totalorder %s21, 1
    %p65 = por %p63, %p64
    %p67 = scmp.ne.s32.totalorder %s52, %s66
    %p68 = scmp.eq.s32.totalorder %s21, 0
    %p69 = por %p67, %p68
    %s71 = sadd.s32 %s70, 1
    %p74 = scmp.eq.s32.totalorder %s15, 1
    %p75 = scmp.ne.s32.totalorder %s70, %s72
    %p76 = scmp.eq.s32.totalorder %s15, 0
    %p77 = por %p75, %p76
    %p78 = scmp.ne.s32.totalorder %s70, %s72
    %p79 = scmp.eq.s32.totalorder %s20, 1
    %p80 = por %p78, %p79
    %p81 = scmp.ne.s32.totalorder %s72, %s73
    %p82 = scmp.eq.s32.totalorder %s20, 0
    %p83 = por %p81, %p82
    %p84 = scmp.ne.s32.totalorder %s72, %s73
    %p85 = scmp.eq.s32.totalorder %s21, 1
    %p86 = por %p84, %p85
    %p88 = scmp.ne.s32.totalorder %s73, %s87
    %p89 = scmp.eq.s32.totalorder %s21, 0
    %p90 = por %p88, %p89
    %s92 = sadd.s32 %s91, 1
    %p95 = scmp.eq.s32.totalorder %s15, 1
    %p96 = scmp.ne.s32.totalorder %s91, %s93
    %p97 = scmp.eq.s32.totalorder %s15, 0
    %p98 = por %p96, %p97
    %p99 = scmp.ne.s32.totalorder %s91, %s93
    %p100 = scmp.eq.s32.totalorder %s20, 1
    %p101 = por %p99, %p100
    %p102 = scmp.ne.s32.totalorder %s93, %s94
    %p103 = scmp.eq.s32.totalorder %s20, 0
    %p104 = por %p102, %p103
    %p105 = scmp.ne.s32.totalorder %s93, %s94
    %p106 = scmp.eq.s32.totalorder %s21, 1
    %p107 = por %p105, %p106
    %p109 = scmp.ne.s32.totalorder %s94, %s108
    %p110 = scmp.eq.s32.totalorder %s21, 0
    %p111 = por %p109, %p110
    %s113 = sadd.s32 %s112, 1
    %p116 = scmp.eq.s32.totalorder %s15, 1
    %p117 = scmp.ne.s32.totalorder %s112, %s114
    %p118 = scmp.eq.s32.totalorder %s15, 0
    %p119 = por %p117, %p118
    %p120 = scmp.ne.s32.totalorder %s112, %s114
    %p121 = scmp.eq.s32.totalorder %s20, 1
    %p122 = por %p120, %p121
    %p123 = scmp.ne.s32.totalorder %s114, %s115
    %p124 = scmp.eq.s32.totalorder %s20, 0
    %p125 = por %p123, %p124
    %p126 = scmp.ne.s32.totalorder %s114, %s115
    %p127 = scmp.eq.s32.totalorder %s21, 1
    %p128 = por %p126, %p127
    %p130 = scmp.ne.s32.totalorder %s115, %s129
    %p131 = scmp.eq.s32.totalorder %s21, 0
    %p132 = por %p130, %p131
    %s134 = sadd.s32 %s133, 1
    %p137 = scmp.eq.s32.totalorder %s15, 1
    %p138 = scmp.ne.s32.totalorder %s133, %s135
    %p139 = scmp.eq.s32.totalorder %s15, 0
    %p140 = por %p138, %p139
    %p141 = scmp.ne.s32.totalorder %s133, %s135
    %p142 = scmp.eq.s32.totalorder %s20, 1
    %p143 = por %p141, %p142
    %p144 = scmp.ne.s32.totalorder %s135, %s136
    %p145 = scmp.eq.s32.totalorder %s20, 0
    %p146 = por %p144, %p145
    %p147 = scmp.ne.s32.totalorder %s135, %s136
    %p148 = scmp.eq.s32.totalorder %s21, 1
    %p149 = por %p147, %p148
    %p151 = scmp.ne.s32.totalorder %s136, %s150
    %p152 = scmp.eq.s32.totalorder %s21, 0
    %p153 = por %p151, %p152
    %s155 = sadd.s32 %s154, 1
    %p158 = scmp.eq.s32.totalorder %s15, 1
    %p159 = scmp.ne.s32.totalorder %s154, %s156
    %p160 = scmp.eq.s32.totalorder %s15, 0
    %p161 = por %p159, %p160
    %p162 = scmp.ne.s32.totalorder %s154, %s156
    %p163 = scmp.eq.s32.totalorder %s20, 1
    %p164 = por %p162, %p163
    %p165 = scmp.ne.s32.totalorder %s156, %s157
    %p166 = scmp.eq.s32.totalorder %s20, 0
    %p167 = por %p165, %p166
    %p168 = scmp.ne.s32.totalorder %s156, %s157
    %p169 = scmp.eq.s32.totalorder %s21, 1
    %p170 = por %p168, %p169
    %p172 = scmp.ne.s32.totalorder %s157, %s171
    %p173 = scmp.eq.s32.totalorder %s21, 0
    %p174 = por %p172, %p173
    %s176 = sadd.s32 %s175, 1
    %p179 = scmp.eq.s32.totalorder %s15, 1
    %p180 = scmp.ne.s32.totalorder %s175, %s177
    %p181 = scmp.eq.s32.totalorder %s15, 0
    %p182 = por %p180, %p181
    %p183 = scmp.ne.s32.totalorder %s175, %s177
    %p184 = scmp.eq.s32.totalorder %s20, 1
    %p185 = por %p183, %p184
    %p186 = scmp.ne.s32.totalorder %s177, %s178
    %p187 = scmp.eq.s32.totalorder %s20, 0
    %p188 = por %p186, %p187
    %p189 = scmp.ne.s32.totalorder %s177, %s178
    %p190 = scmp.eq.s32.totalorder %s21, 1
    %p191 = por %p189, %p190
    %p193 = scmp.ne.s32.totalorder %s178, %s192
    %p194 = scmp.eq.s32.totalorder %s21, 0
    %p195 = por %p193, %p194
    %s197 = sadd.s32 %s196, 1
    %p200 = scmp.eq.s32.totalorder %s15, 1
    %p201 = scmp.ne.s32.totalorder %s196, %s198
    %p202 = scmp.eq.s32.totalorder %s15, 0
    %p203 = por %p201, %p202
    %p204 = scmp.ne.s32.totalorder %s196, %s198
    %p205 = scmp.eq.s32.totalorder %s20, 1
    %p206 = por %p204, %p205
    %p207 = scmp.ne.s32.totalorder %s198, %s199
    %p208 = scmp.eq.s32.totalorder %s20, 0
    %p209 = por %p207, %p208
    %p210 = scmp.ne.s32.totalorder %s198, %s199
    %p211 = scmp.eq.s32.totalorder %s21, 1
    %p212 = por %p210, %p211
    %p214 = scmp.ne.s32.totalorder %s199, %s213
    %p215 = scmp.eq.s32.totalorder %s21, 0
    %p216 = por %p214, %p215
    %s217 = ssub.s32 %s15, %s22
    %p218 = scmp.eq.s32.totalorder %s217, 0
    %s220 = sadd.s32 %s219, 1
    %s221 = scalar_select %p218, %s219, %s220
    %p224 = pneg %p218
    %p225 = scmp.eq.s32.totalorder %s15, 1
    %p226 = por %p224, %p225
    %p227 = scmp.ne.s32.totalorder %s219, %s222
    %p228 = scmp.eq.s32.totalorder %s15, 0
    %p229 = por %p227, %p228
    %p230 = scmp.ne.s32.totalorder %s219, %s222
    %p231 = scmp.eq.s32.totalorder %s20, 1
    %p232 = por %p230, %p231
    %p233 = scmp.ne.s32.totalorder %s222, %s223
    %p234 = scmp.eq.s32.totalorder %s20, 0
    %p235 = por %p233, %p234
    %p236 = scmp.ne.s32.totalorder %s222, %s223
    %p237 = scmp.eq.s32.totalorder %s21, 1
    %p238 = por %p236, %p237
    %p240 = scmp.ne.s32.totalorder %s223, %s239
    %p241 = scmp.eq.s32.totalorder %s21, 0
    %p242 = por %p240, %p241
    %p243 = scmp.le.s32.totalorder 1, %s15
    %p244 = scmp.lt.s32.totalorder %s15, 3
    %p245 = pnand %p243, %p244
    %p246 = pneg %p245
    // Predicated region
    $region9: #{tpu_custom_call.1} parent=5 // pred_check
      _
    $region10: #{tpu_custom_call.1} parent=5 // pred_check_branch
      %248 = sbr.rel (%p245) target = $region12
    $region11: #{tpu_custom_call.1} parent=5 // pred_region
      %s249 = ssub.s32 %s15, 1
      // Predicated region
      $region13: #{tpu_custom_call.1} parent=11 // pred_check
        %p250 = pneg %p62
      $region14: #{tpu_custom_call.1} parent=11 // pred_check_branch
        %252 = sbr.rel (%p250) target = $region16
      $region15: #{tpu_custom_call.1} parent=11 // pred_region
        _
      $region16: #{tpu_custom_call.1} parent=11 // pred_fallthru
        _
      // Predicated region
      $region17: #{tpu_custom_call.1} parent=11 // pred_check
        %p253 = pneg %p83
      $region18: #{tpu_custom_call.1} parent=11 // pred_check_branch
        %255 = sbr.rel (%p253) target = $region20
      $region19: #{tpu_custom_call.1} parent=11 // pred_region
        _
      $region20: #{tpu_custom_call.1} parent=11 // pred_fallthru
        _
      // Predicated region
      $region21: #{tpu_custom_call.1} parent=11 // pred_check
        %p256 = pneg %p104
      $region22: #{tpu_custom_call.1} parent=11 // pred_check_branch
        %258 = sbr.rel (%p256) target = $region24
      $region23: #{tpu_custom_call.1} parent=11 // pred_region
        _
      $region24: #{tpu_custom_call.1} parent=11 // pred_fallthru
        _
      // Predicated region
      $region25: #{tpu_custom_call.1} parent=11 // pred_check
        %p259 = pneg %p125
      $region26: #{tpu_custom_call.1} parent=11 // pred_check_branch
        %261 = sbr.rel (%p259) target = $region28
      $region27: #{tpu_custom_call.1} parent=11 // pred_region
        _
      $region28: #{tpu_custom_call.1} parent=11 // pred_fallthru
        _
      // Predicated region
      $region29: #{tpu_custom_call.1} parent=11 // pred_check
        %p262 = pneg %p146
      $region30: #{tpu_custom_call.1} parent=11 // pred_check_branch
        %264 = sbr.rel (%p262) target = $region32
      $region31: #{tpu_custom_call.1} parent=11 // pred_region
        _
      $region32: #{tpu_custom_call.1} parent=11 // pred_fallthru
        _
      // Predicated region
      $region33: #{tpu_custom_call.1} parent=11 // pred_check
        %p265 = pneg %p167
      $region34: #{tpu_custom_call.1} parent=11 // pred_check_branch
        %267 = sbr.rel (%p265) target = $region36
      $region35: #{tpu_custom_call.1} parent=11 // pred_region
        _
      $region36: #{tpu_custom_call.1} parent=11 // pred_fallthru
        _
      // Predicated region
      $region37: #{tpu_custom_call.1} parent=11 // pred_check
        %p268 = pneg %p188
      $region38: #{tpu_custom_call.1} parent=11 // pred_check_branch
        %270 = sbr.rel (%p268) target = $region40
      $region39: #{tpu_custom_call.1} parent=11 // pred_region
        _
      $region40: #{tpu_custom_call.1} parent=11 // pred_fallthru
        _
      // Predicated region
      $region41: #{tpu_custom_call.1} parent=11 // pred_check
        %p271 = pneg %p209
      $region42: #{tpu_custom_call.1} parent=11 // pred_check_branch
        %273 = sbr.rel (%p271) target = $region44
      $region43: #{tpu_custom_call.1} parent=11 // pred_region
        _
      $region44: #{tpu_custom_call.1} parent=11 // pred_fallthru
        _
    $region12: #{tpu_custom_call.1} parent=5 // pred_fallthru
      _
    %p274 = scmp.lt.s32.totalorder %s15, 2
    // Predicated region
    $region45: #{tpu_custom_call.1} parent=5 // pred_check
      %p275 = pneg %p274
    $region46: #{tpu_custom_call.1} parent=5 // pred_check_branch
      %277 = sbr.rel (%p275) target = $region48
    $region47: #{tpu_custom_call.1} parent=5 // pred_region
      // Predicated region
      $region49: #{tpu_custom_call.1} parent=47 // pred_check
        %p278 = pneg %p35
      $region50: #{tpu_custom_call.1} parent=47 // pred_check_branch
        %280 = sbr.rel (%p278) target = $region52
      $region51: #{tpu_custom_call.1} parent=47 // pred_region
        %s281 = smul.u32 4, %s15
        %p282 = scmp.lt.s32.totalorder %s281, 7
        %s283 = scalar_select %p282, %s281, 7
        %s284 = smul.addr %s283, 4
        %s285 = scalar_lea.vmem %s0, %s284
        %s286 = smul.u32 4, %s15
      $region52: #{tpu_custom_call.1} parent=47 // pred_fallthru
        _
    $region48: #{tpu_custom_call.1} parent=5 // pred_fallthru
      _
    %p287 = scmp.le.s32.totalorder 1, %s15
    %p288 = scmp.lt.s32.totalorder %s15, 3
    %p289 = pnand %p287, %p288
    %p290 = pneg %p289
    // Predicated region
    $region53: #{tpu_custom_call.1} parent=5 // pred_check
      _
    $region54: #{tpu_custom_call.1} parent=5 // pred_check_branch
      %292 = sbr.rel (%p289) target = $region56
    $region55: #{tpu_custom_call.1} parent=5 // pred_region
      %s293 = ssub.s32 %s15, 1
      %s294 = smul.u32 4, %s20
      %p295 = scmp.lt.s32.totalorder %s294, 7
      %s296 = scalar_select %p295, %s294, 7
      %s297 = smul.addr %s296, 4
      %s298 = scalar_lea.vmem %s0, %s297
      %p299 = pneg %p41
      %p300 = pneg %p38
      %p301 = pneg %p62
      %p302 = pneg %p59
      %p303 = pneg %p83
      %p304 = pneg %p80
      %p305 = pneg %p104
      %p306 = pneg %p101
      %p307 = pneg %p125
      %p308 = pneg %p122
      %p309 = pneg %p146
      %p310 = pneg %p143
      %p311 = pneg %p167
      %p312 = pneg %p164
      %p313 = pneg %p188
      %p314 = pneg %p185
      %p315 = pneg %p209
      %p316 = pneg %p206
      %p317 = pneg %p235
      %p318 = pneg %p232
      %s319 = smul.u32 4, %s20
      %p320 = scmp.lt.s32.totalorder %s319, 7
      %s321 = scalar_select %p320, %s319, 7
      %s322 = smul.addr %s321, 8
      %s323 = scalar_lea.vmem %s9, %s322
      %s324 = smul.u32 4, %s20
      %p325 = scmp.lt.s32.totalorder %s324, 7
      %s326 = scalar_select %p325, %s324, 7
      %s327 = smul.addr %s326, 4
      %s328 = scalar_lea.vmem %s0, %s327
      %s329 = smul.u32 4, %s20
      %s330 = smul.u32 4, %s20
      %p331 = scmp.lt.s32.totalorder %s330, 7
      %s332 = scalar_select %p331, %s330, 7
      %s333 = smul.addr %s332, 8
      %s334 = scalar_lea.vmem %s9, %s333
      %s335 = smul.u32 4, %s20
      %v337 = vld [vmem:[%s328] sm:$0xf]
      %v338 = vld [vmem:[%s328 + $0x4] sm:$0xf]
      %v339 = vld [vmem:[%s328 + $0x8] sm:$0xf]
      %v340 = vld [vmem:[%s328 + $0xc] sm:$0xf]
      %v341 = vld [vmem:[%s1] sm:$0xf]
      %v342 = vld [vmem:[%s1 + $0x4] sm:$0xf]
      %v347 = vunpack.c.l.b16 %v337
      %v348 = vunpack.c.l.b16 %v338
      %v349 = vunpack.c.l.b16 %v339
      %v350 = vunpack.c.l.b16 %v340
      %v351 = vpack.c.b16 %v348, %v347
      %v352 = vpack.c.b16 %v350, %v349
      %v355 = vunpack.c.l.b16 %v341
      %v356 = vunpack.c.l.b16 %v342
      %v357 = vpack.c.b16 %v356, %v355
      %vm359 = vcmask 130048
      %v361 = vsel %vm359, %v351, 0
      %v364 = vsel %vm359, %v352, 0
      %366 = vmatpush.bf16.msra.mxu0 0
      %367 = vmatpush.bf16.msra.mxu0 0
      %368 = vmatpush.bf16.msra.mxu0 0
      %369 = vmatpush.bf16.msra.mxu0 0
      %370 = vmatpush.bf16.msra.mxu0 0
      %371 = vmatpush.bf16.msra.mxu0 0
      %372 = vmatpush.bf16.msra.mxu0 0
      %373 = vmatpush.bf16.msra.mxu0 %v357
      %374 = vmatmul.bf16.gmra.mxu0 %v361
      %v375 = vpop.f32.mrf.mxu0
      %v376 = vadd.f32 0.0, %v375
      %v377 = vpop.f32.mrf.mxu0
      %v378 = vadd.f32 0.0, %v377
      %379 = vmatmul.bf16.gmra.mxu0 %v364
      %v380 = vpop.f32.mrf.mxu0
      %v381 = vadd.f32 0.0, %v380
      %v382 = vpop.f32.mrf.mxu0
      %v383 = vadd.f32 0.0, %v382
      %384 = vdwg.mxu0
      %v385 = vpack.c.bf16 %v376, %v376
      %v386 = vpack.c.bf16 %v378, %v378
      %v387 = vpack.c.bf16 %v381, %v381
      %v388 = vpack.c.bf16 %v383, %v383
      %v389 = vld [vmem:[%s2] sm:$0x1]
      %v391 = vpack.i.b16 %v389, %v389
      %v393 = vperm.slane %v391, 0
      %v394 = vunpack.c.l.bf16 %v385
      %v395 = vunpack.c.l.bf16 %v386
      %v396 = vunpack.c.l.bf16 %v387
      %v397 = vunpack.c.l.bf16 %v388
      %v398 = vunpack.c.l.bf16 %v393
      %v399 = vadd.f32 %v394, %v398
      %v400 = vadd.f32 %v395, %v398
      %v401 = vadd.f32 %v396, %v398
      %v402 = vadd.f32 %v397, %v398
      %v403 = vpack.c.bf16 %v399, %v399
      %v404 = vpack.c.bf16 %v400, %v400
      %v405 = vpack.c.bf16 %v401, %v401
      %v406 = vpack.c.bf16 %v402, %v402
      %v407 = vunpack.c.l.bf16 %v403
      %v408 = vunpack.c.l.bf16 %v404
      %v409 = vunpack.c.l.bf16 %v405
      %v410 = vunpack.c.l.bf16 %v406
      %v411 = vmax.f32 %v407, 0.0
      %v412 = vmax.f32 %v408, 0.0
      %v413 = vmax.f32 %v409, 0.0
      %v414 = vmax.f32 %v410, 0.0
      %v415 = vpack.c.bf16 %v412, %v411
      %v416 = vpack.c.bf16 %v414, %v413
      %v417 = vld [vmem:[%s3] sm:$0xf]
      %v418 = vld [vmem:[%s3 + $0x4] sm:$0xf]
      %v419 = vld [vmem:[%s3 + $0x8] sm:$0xf]
      %v420 = vld [vmem:[%s3 + $0xc] sm:$0xf]
      %v421 = vld [vmem:[%s3 + $0x10] sm:$0xf]
      %v422 = vld [vmem:[%s3 + $0x14] sm:$0xf]
      %v423 = vld [vmem:[%s3 + $0x18] sm:$0xf]
      %v424 = vld [vmem:[%s3 + $0x1c] sm:$0xf]
      %v433 = vunpack.c.l.b16 %v417
      %v434 = vunpack.c.l.b16 %v418
      %v435 = vunpack.c.l.b16 %v419
      %v436 = vunpack.c.l.b16 %v420
      %v437 = vunpack.c.l.b16 %v421
      %v438 = vunpack.c.l.b16 %v422
      %v439 = vunpack.c.l.b16 %v423
      %v440 = vunpack.c.l.b16 %v424
      %v441 = vpack.c.b16 %v434, %v433
      %v442 = vpack.c.b16 %v436, %v435
      %v443 = vpack.c.b16 %v438, %v437
      %v444 = vpack.c.b16 %v440, %v439
      %vm449 = vcmask 523264
      %v451 = vsel %vm449, %v415, 0
      %v454 = vsel %vm449, %v416, 0
      %456 = vmatpush.bf16.msra.mxu0 0
      %457 = vmatpush.bf16.msra.mxu0 0
      %458 = vmatpush.bf16.msra.mxu0 0
      %459 = vmatpush.bf16.msra.mxu0 0
      %460 = vmatpush.bf16.msra.mxu0 %v444
      %461 = vmatpush.bf16.msra.mxu0 %v443
      %462 = vmatpush.bf16.msra.mxu0 %v442
      %463 = vmatpush.bf16.msra.mxu0 %v441
      %464 = vmatmul.bf16.gmra.mxu0 %v451
      %v465 = vpop.f32.mrf.mxu0
      %v466 = vadd.f32 0.0, %v465
      %v467 = vpop.f32.mrf.mxu0
      %v468 = vadd.f32 0.0, %v467
      %469 = vmatmul.bf16.gmra.mxu0 %v454
      %v470 = vpop.f32.mrf.mxu0
      %v471 = vadd.f32 0.0, %v470
      %v472 = vpop.f32.mrf.mxu0
      %v473 = vadd.f32 0.0, %v472
      %474 = vdwg.mxu0
      %v475 = vpack.c.bf16 %v466, %v466
      %v476 = vpack.c.bf16 %v468, %v468
      %v477 = vpack.c.bf16 %v471, %v471
      %v478 = vpack.c.bf16 %v473, %v473
      %v479 = vld [vmem:[%s4] sm:$0x1]
      %v481 = vpack.i.b16 %v479, %v479
      %v483 = vperm.slane %v481, 0
      %v484 = vunpack.c.l.bf16 %v475
      %v485 = vunpack.c.l.bf16 %v476
      %v486 = vunpack.c.l.bf16 %v477
      %v487 = vunpack.c.l.bf16 %v478
      %v488 = vunpack.c.l.bf16 %v483
      %v489 = vadd.f32 %v484, %v488
      %v490 = vadd.f32 %v485, %v488
      %v491 = vadd.f32 %v486, %v488
      %v492 = vadd.f32 %v487, %v488
      %v493 = vpack.c.bf16 %v489, %v489
      %v494 = vpack.c.bf16 %v490, %v490
      %v495 = vpack.c.bf16 %v491, %v491
      %v496 = vpack.c.bf16 %v492, %v492
      %v497 = vunpack.c.l.bf16 %v493
      %v498 = vunpack.c.l.bf16 %v494
      %v499 = vunpack.c.l.bf16 %v495
      %v500 = vunpack.c.l.bf16 %v496
      %v501 = vmax.f32 %v497, 0.0
      %v502 = vmax.f32 %v498, 0.0
      %v503 = vmax.f32 %v499, 0.0
      %v504 = vmax.f32 %v500, 0.0
      %v505 = vpack.c.bf16 %v502, %v501
      %v506 = vpack.c.bf16 %v504, %v503
      %v507 = vld [vmem:[%s5] sm:$0xf]
      %v508 = vld [vmem:[%s5 + $0x4] sm:$0xf]
      %v509 = vld [vmem:[%s5 + $0x8] sm:$0xf]
      %v510 = vld [vmem:[%s5 + $0xc] sm:$0xf]
      %v515 = vunpack.c.l.b16 %v507
      %v516 = vunpack.c.l.b16 %v508
      %v517 = vunpack.c.l.b16 %v509
      %v518 = vunpack.c.l.b16 %v510
      %v519 = vpack.c.b16 %v516, %v515
      %v520 = vpack.c.b16 %v518, %v517
      %vm523 = vcmask 261120
      %v525 = vsel %vm523, %v505, 0
      %v528 = vsel %vm523, %v506, 0
      %530 = vmatpush.bf16.msra.mxu0 0
      %531 = vmatpush.bf16.msra.mxu0 0
      %532 = vmatpush.bf16.msra.mxu0 0
      %533 = vmatpush.bf16.msra.mxu0 0
      %534 = vmatpush.bf16.msra.mxu0 0
      %535 = vmatpush.bf16.msra.mxu0 0
      %536 = vmatpush.bf16.msra.mxu0 %v520
      %537 = vmatpush.bf16.msra.mxu0 %v519
      %538 = vmatmul.bf16.gmra.mxu0 %v525
      %v539 = vpop.f32.mrf.mxu0
      %v540 = vadd.f32 0.0, %v539
      %v541 = vpop.f32.mrf.mxu0
      %v542 = vadd.f32 0.0, %v541
      %543 = vmatmul.bf16.gmra.mxu0 %v528
      %v544 = vpop.f32.mrf.mxu0
      %v545 = vadd.f32 0.0, %v544
      %v546 = vpop.f32.mrf.mxu0
      %v547 = vadd.f32 0.0, %v546
      %548 = vdwg.mxu0
      %v549 = vpack.c.bf16 %v540, %v540
      %v550 = vpack.c.bf16 %v542, %v542
      %v551 = vpack.c.bf16 %v545, %v545
      %v552 = vpack.c.bf16 %v547, %v547
      %v553 = vld [vmem:[%s6] sm:$0x1]
      %v555 = vpack.i.b16 %v553, %v553
      %v557 = vperm.slane %v555, 0
      %v558 = vunpack.c.l.bf16 %v549
      %v559 = vunpack.c.l.bf16 %v550
      %v560 = vunpack.c.l.bf16 %v551
      %v561 = vunpack.c.l.bf16 %v552
      %v562 = vunpack.c.l.bf16 %v557
      %v563 = vadd.f32 %v558, %v562
      %v564 = vadd.f32 %v559, %v562
      %v565 = vadd.f32 %v560, %v562
      %v566 = vadd.f32 %v561, %v562
      %v567 = vpack.c.bf16 %v563, %v563
      %v568 = vpack.c.bf16 %v564, %v564
      %v569 = vpack.c.bf16 %v565, %v565
      %v570 = vpack.c.bf16 %v566, %v566
      %v571 = vunpack.c.l.bf16 %v567
      %v572 = vunpack.c.l.bf16 %v568
      %v573 = vunpack.c.l.bf16 %v569
      %v574 = vunpack.c.l.bf16 %v570
      %v575 = vmax.f32 %v571, 0.0
      %v576 = vmax.f32 %v572, 0.0
      %v577 = vmax.f32 %v573, 0.0
      %v578 = vmax.f32 %v574, 0.0
      %v579 = vpack.c.bf16 %v576, %v575
      %v580 = vpack.c.bf16 %v578, %v577
      %v581 = vld [vmem:[%s7] sm:$0xf]
      %v582 = vld [vmem:[%s7 + $0x4] sm:$0xf]
      %v583 = vld [vmem:[%s8] sm:$0x1]
      %v585 = vperm.slane %v583, 0
      %v589 = vunpack.c.l.b16 %v581
      %v590 = vunpack.c.l.b16 %v582
      %v591 = vpack.c.b16 %v590, %v589
      %v594 = vsel %vm359, %v579, 0
      %v597 = vsel %vm359, %v580, 0
      %599 = vmatpush.bf16.msra.mxu0 0
      %600 = vmatpush.bf16.msra.mxu0 0
      %601 = vmatpush.bf16.msra.mxu0 0
      %602 = vmatpush.bf16.msra.mxu0 0
      %603 = vmatpush.bf16.msra.mxu0 0
      %604 = vmatpush.bf16.msra.mxu0 0
      %605 = vmatpush.bf16.msra.mxu0 0
      %606 = vmatpush.bf16.msra.mxu0 %v591
      %607 = vmatmul.bf16.gmra.mxu0 %v594
      %v608 = vpop.f32.mrf.mxu0
      %v609 = vadd.f32 %v585, %v608
      %v610 = vpop.f32.mrf.mxu0
      %v611 = vadd.f32 %v585, %v610
      %612 = vmatmul.bf16.gmra.mxu0 %v597
      %v613 = vpop.f32.mrf.mxu0
      %v614 = vadd.f32 %v585, %v613
      %v615 = vpop.f32.mrf.mxu0
      %v616 = vadd.f32 %v585, %v615
      %617 = vdwg.mxu0
      %vm618 = vcmask 31744
      %619 = vst.msk [vmem:[%s334] sm:$0xff] %vm618, %v609
      %620 = vst.msk [vmem:[%s334 + $0x8] sm:$0xff] %vm618, %v611
      %621 = vst.msk [vmem:[%s334 + $0x10] sm:$0xff] %vm618, %v614
      %622 = vst.msk [vmem:[%s334 + $0x18] sm:$0xff] %vm618, %v616
      %s623 = smul.u32 4, %s20
      %p624 = scmp.lt.s32.totalorder %s623, 7
      %s625 = scalar_select %p624, %s623, 7
      %s626 = smul.addr %s625, 8
      %s627 = scalar_lea.vmem %s9, %s626
      // Predicated region
      $region57: #{tpu_custom_call.1} parent=55 // pred_check
        %p628 = pneg %p232
      $region58: #{tpu_custom_call.1} parent=55 // pred_check_branch
        %630 = sbr.rel (%p628) target = $region60
      $region59: #{tpu_custom_call.1} parent=55 // pred_region
        %s631 = smul.u32 4, %s20
      $region60: #{tpu_custom_call.1} parent=55 // pred_fallthru
        _
    $region56: #{tpu_custom_call.1} parent=5 // pred_fallthru
      _
    %p632 = scmp.le.s32.totalorder 2, %s15
    // Predicated region
    $region61: #{tpu_custom_call.1} parent=5 // pred_check
      %p633 = pneg %p632
    $region62: #{tpu_custom_call.1} parent=5 // pred_check_branch
      %635 = sbr.rel (%p633) target = $region64
    $region63: #{tpu_custom_call.1} parent=5 // pred_region
      %s636 = ssub.s32 %s15, 2
      // Predicated region
      $region65: #{tpu_custom_call.1} parent=63 // pred_check
        %p637 = pneg %p238
      $region66: #{tpu_custom_call.1} parent=63 // pred_check_branch
        %639 = sbr.rel (%p637) target = $region68
      $region67: #{tpu_custom_call.1} parent=63 // pred_region
        %s640 = smul.u32 4, %s21
        %p641 = scmp.lt.s32.totalorder %s640, 7
        %s642 = scalar_select %p641, %s640, 7
        %s643 = smul.addr %s642, 8
        %s644 = scalar_lea.vmem %s9, %s643
      $region68: #{tpu_custom_call.1} parent=63 // pred_fallthru
        _
    $region64: #{tpu_custom_call.1} parent=5 // pred_fallthru
      _
  $region6: #{tpu_custom_call.1} parent=0 // loop_footer
    %s19 = sadd.s32 1, %s15
  $region7: #{tpu_custom_call.1} parent=0 // loop_footer_branch
    %14 = sbr.rel target = $region3
  $region8: #{tpu_custom_call.1} parent=0 // loop_exit
    _

</llo_original>
